<compile_context>
chip_gen: v7x
topology: tpu7x:2x2x1
jax: 0.10.0
libtpu: 0.0.40
codegen_flags: <defaults>
</compile_context>

<pallas_src>
import functools

import numpy as np
import jax
import jax.numpy as jnp
from jax.experimental import pallas as pl
from jax.experimental.pallas import tpu as pltpu


def _dense_mixer_kernel(x_ref, m_ref, o_ref, acc_ref, *, nheads, headdim,
                        compute_dtype):
    # x_ref / o_ref: (bb, L, D) lane-dense activation block.
    # m_ref:         (nheads, L, L), pre-scaled by std_dev, resident in VMEM.
    # acc_ref:       (L, D) f32 scratch accumulator (per batch row).
    bb = x_ref.shape[0]
    for b in range(bb):                       # static unroll (bb capped small)
        for n in range(nheads):               # static unroll (nheads small)
            x_nb = x_ref[b, :, n * headdim:(n + 1) * headdim]   # lazy (L, H) slice
            if compute_dtype is not None:
                x_nb = x_nb.astype(compute_dtype)
            # (L, L) @ (L, H) on the MXU, f32 accumulation, straight to scratch.
            acc_ref[:, n * headdim:(n + 1) * headdim] = jnp.dot(
                m_ref[n], x_nb, preferred_element_type=jnp.float32)
        # Fused residual add; one lane-dense (L, D) store per batch row.
        o_ref[b] = (acc_ref[...] + x_ref[b].astype(jnp.float32)).astype(o_ref.dtype)


def dense_mixer(hidden_states, M, nheads, headdim, std_dev, *,
                batch_block=None, compute_dtype=jnp.bfloat16):
    """hidden_states: (B, L, nheads*headdim); M: (nheads, L, L)."""
    B, L, D = hidden_states.shape
    assert D == nheads * headdim
    assert M.shape == (nheads, L, L)

    # Fold std_dev into M once (cheap wrapper-side scale of nheads*L*L weights)
    # and cast to the MXU-native compute dtype (halves M's DMA + residency).
    m_scaled = std_dev * M
    if compute_dtype is not None:
        m_scaled = m_scaled.astype(compute_dtype)
    m_itemsize = m_scaled.dtype.itemsize
    x_itemsize = hidden_states.dtype.itemsize

    # Generation-aware VMEM budget (v5e/v6e: 128 MiB, v7x: 64 MiB per TC).
    try:
        vmem_capacity = int(pltpu.get_tpu_info().vmem_capacity_bytes)
    except Exception:
        vmem_capacity = 64 << 20          # conservative fallback (v7x per-TC)
    vmem_cap = max(32 << 20, int(vmem_capacity * 0.8))

    def vmem_needed(bb, single_buffer_m=True):
        blk = bb * L * D
        return (2 * blk * x_itemsize                    # double-buffered input
                + 2 * blk * x_itemsize                  # double-buffered output
                + (1 if single_buffer_m else 2) * nheads * L * L * m_itemsize
                + L * D * 4                             # f32 accumulator scratch
                + (8 << 20))                            # compiler-scratch headroom

    if batch_block is None:
        # A few MiB per block amortizes the ~0.35us per-grid-step cost; cap the
        # static unroll length at 8 batch rows per step.
        rows = max(1, (4 << 20) // max(L * D * x_itemsize, 1))
        batch_block = max(1, min(B, rows, 8))
    bb = int(batch_block)
    while bb > 1 and vmem_needed(bb) > vmem_cap:
        bb = max(1, bb // 2)
    # TODO(synk): if nheads*L*L no longer fits VMEM even at bb=1 (very large L
    # on v7x), add a trailing "arbitrary" contraction grid axis over t with a
    # f32 accumulator and tile M as (nheads, L, tk) blocks.

    grid = (pl.cdiv(B, bb),)
    vmem_limit = int(min(vmem_cap, max(vmem_needed(bb), 32 << 20)))

    kernel = functools.partial(_dense_mixer_kernel, nheads=nheads,
                               headdim=headdim, compute_dtype=compute_dtype)

    def build(single_buffer_m):
        if single_buffer_m:
            # Constant block index -> fetched once; single buffer saves VMEM.
            m_spec = pl.BlockSpec((nheads, L, L), lambda i: (0, 0, 0),
                                  pipeline_mode=pl.Buffered(1))
        else:
            m_spec = pl.BlockSpec((nheads, L, L), lambda i: (0, 0, 0))
        return pl.pallas_call(
            kernel,
            out_shape=jax.ShapeDtypeStruct((B, L, D), hidden_states.dtype),
            grid_spec=pltpu.PrefetchScalarGridSpec(
                num_scalar_prefetch=0,
                grid=grid,
                in_specs=[
                    pl.BlockSpec((bb, L, D), lambda i: (i, 0, 0)),  # activations
                    m_spec,                                         # mixing mats
                ],
                out_specs=pl.BlockSpec((bb, L, D), lambda i: (i, 0, 0)),
                scratch_shapes=[pltpu.VMEM((L, D), jnp.float32)]),
            compiler_params=pltpu.CompilerParams(
                dimension_semantics=("parallel",),
                vmem_limit_bytes=vmem_limit))

    try:
        return build(True)(hidden_states, m_scaled)
    except Exception:
        # Fallback if single-buffering via pl.Buffered(1) is not supported.
        return build(False)(hidden_states, m_scaled)


def reference(hidden_states, M, nheads, headdim, std_dev):
    B, L, D = hidden_states.shape
    x = hidden_states.reshape(B, L, nheads, headdim).transpose(0, 2, 1, 3)  # b n t h
    out = jnp.einsum('bnth,nlt->bnlh', x, M) * std_dev
    out = out.transpose(0, 2, 1, 3).reshape(B, L, D)
    return out + hidden_states


if __name__ == "__main__":
    # Module config (small, consistent with Dense.__init__):
    d_model = 64
    expand = 2
    headdim = 64
    max_seq_len = 16
    d_inner = expand * d_model            # 128
    nheads = d_inner // headdim           # 2
    std_dev = 1.0 / np.sqrt(max_seq_len)

    B, L = 2, max_seq_len

    key = jax.random.PRNGKey(0)
    k_x, k_m = jax.random.split(key)

    # Deterministic parameter init (xavier_normal_ on (nheads, L, L)):
    fan_in = max_seq_len * max_seq_len
    fan_out = nheads * max_seq_len
    xavier_std = np.sqrt(2.0 / (fan_in + fan_out))
    M = xavier_std * jax.random.normal(
        k_m, (nheads, max_seq_len, max_seq_len), dtype=jnp.float32)

    x = jax.random.normal(k_x, (B, L, d_inner), dtype=jnp.float32)

    ref = reference(x, M, nheads, headdim, std_dev)

    # Exact-precision path (f32 matmul operands) — tight tolerance.
    out_f32 = jax.block_until_ready(
        dense_mixer(x, M, nheads, headdim, std_dev, compute_dtype=None))
    np.testing.assert_allclose(np.asarray(out_f32), np.asarray(ref),
                               rtol=1e-5, atol=1e-5)

    # Default fast path (bf16 MXU operands, f32 accumulation + f32 residual).
    out_bf16 = jax.block_until_ready(
        dense_mixer(x, M, nheads, headdim, std_dev))
    np.testing.assert_allclose(np.asarray(out_bf16), np.asarray(ref),
                               rtol=1e-2, atol=1e-2)

    print("KERNEL_OK")
</pallas_src>

<mosaic_0001>
module attributes {stable_mosaic.version = 11 : i64} {
  func.func @_dense_mixer_kernel(%arg0: i32, %arg1: memref<2x16x128xf32, #tpu.memory_space<vmem>>, %arg2: memref<2x16x16xf32, #tpu.memory_space<vmem>>, %arg3: memref<2x16x128xf32, #tpu.memory_space<vmem>>, %arg4: memref<16x128xf32, #tpu.memory_space<vmem>>) attributes {dimension_semantics = [#tpu.dimension_semantics<parallel>], iteration_bounds = array<i64: 1>, scalar_prefetch = 0 : i64, scratch_operands = 1 : i64, tpu.core_type = #tpu.core_type<tc>, window_params = [{transform_indices = @transform_0, window_bounds = array<i64: 2, 16, 128>}, {pipeline_mode = #tpu.pipeline_mode<synchronous>, transform_indices = @transform_1, window_bounds = array<i64: 2, 16, 16>}, {transform_indices = @transform_2, window_bounds = array<i64: 2, 16, 128>}]} {
    %c0 = arith.constant 0 : index
    %c0_0 = arith.constant 0 : index
    %c0_1 = arith.constant 0 : index
    %0 = vector.load %arg1[%c0, %c0_0, %c0_1] : memref<2x16x128xf32, #tpu.memory_space<vmem>>, vector<1x16x64xf32>
    %1 = vector.shape_cast %0 : vector<1x16x64xf32> to vector<16x64xf32>
    %c0_2 = arith.constant 0 : index
    %c0_3 = arith.constant 0 : index
    %c0_4 = arith.constant 0 : index
    %2 = vector.load %arg2[%c0_2, %c0_3, %c0_4] : memref<2x16x16xf32, #tpu.memory_space<vmem>>, vector<1x16x16xf32>
    %3 = vector.shape_cast %2 : vector<1x16x16xf32> to vector<16x16xf32>
    %cst = arith.constant dense<0.000000e+00> : vector<16x64xf32>
    %4 = tpu.matmul %3, %1, %cst {dimension_numbers = #tpu.dot_dimension_numbers<[1], [0], [0], [1], [0, 0, 1, 1], [], []>} : vector<16x16xf32>, vector<16x64xf32>, vector<16x64xf32> -> vector<16x64xf32>
    %c0_5 = arith.constant 0 : index
    %c0_6 = arith.constant 0 : index
    %5 = vector.load %arg4[%c0_5, %c0_6] : memref<16x128xf32, #tpu.memory_space<vmem>>, vector<16x64xf32>
    tpu.vector_store %arg4[%c0_5, %c0_6], %4 {strides = array<i32>} : memref<16x128xf32, #tpu.memory_space<vmem>>, vector<16x64xf32>,
    %c0_7 = arith.constant 0 : index
    %c0_8 = arith.constant 0 : index
    %c64 = arith.constant 64 : index
    %6 = vector.load %arg1[%c0_7, %c0_8, %c64] : memref<2x16x128xf32, #tpu.memory_space<vmem>>, vector<1x16x64xf32>
    %7 = vector.shape_cast %6 : vector<1x16x64xf32> to vector<16x64xf32>
    %c1 = arith.constant 1 : index
    %c0_9 = arith.constant 0 : index
    %c0_10 = arith.constant 0 : index
    %8 = vector.load %arg2[%c1, %c0_9, %c0_10] : memref<2x16x16xf32, #tpu.memory_space<vmem>>, vector<1x16x16xf32>
    %9 = vector.shape_cast %8 : vector<1x16x16xf32> to vector<16x16xf32>
    %cst_11 = arith.constant dense<0.000000e+00> : vector<16x64xf32>
    %10 = tpu.matmul %9, %7, %cst_11 {dimension_numbers = #tpu.dot_dimension_numbers<[1], [0], [0], [1], [0, 0, 1, 1], [], []>} : vector<16x16xf32>, vector<16x64xf32>, vector<16x64xf32> -> vector<16x64xf32>
    %c0_12 = arith.constant 0 : index
    %c64_13 = arith.constant 64 : index
    %11 = vector.load %arg4[%c0_12, %c64_13] : memref<16x128xf32, #tpu.memory_space<vmem>>, vector<16x64xf32>
    tpu.vector_store %arg4[%c0_12, %c64_13], %10 {strides = array<i32>} : memref<16x128xf32, #tpu.memory_space<vmem>>, vector<16x64xf32>,
    %c0_14 = arith.constant 0 : index
    %c0_15 = arith.constant 0 : index
    %12 = vector.load %arg4[%c0_14, %c0_15] : memref<16x128xf32, #tpu.memory_space<vmem>>, vector<16x128xf32>
    %c0_16 = arith.constant 0 : index
    %c0_17 = arith.constant 0 : index
    %c0_18 = arith.constant 0 : index
    %13 = vector.load %arg1[%c0_16, %c0_17, %c0_18] : memref<2x16x128xf32, #tpu.memory_space<vmem>>, vector<1x16x128xf32>
    %14 = vector.shape_cast %13 : vector<1x16x128xf32> to vector<16x128xf32>
    %15 = arith.addf %12, %14 : vector<16x128xf32>
    %c0_19 = arith.constant 0 : index
    %c0_20 = arith.constant 0 : index
    %c0_21 = arith.constant 0 : index
    %16 = vector.load %arg3[%c0_19, %c0_20, %c0_21] : memref<2x16x128xf32, #tpu.memory_space<vmem>>, vector<1x16x128xf32>
    %17 = vector.shape_cast %16 : vector<1x16x128xf32> to vector<16x128xf32>
    %18 = vector.shape_cast %15 : vector<16x128xf32> to vector<1x16x128xf32>
    tpu.vector_store %arg3[%c0_19, %c0_20, %c0_21], %18 {strides = array<i32>} : memref<2x16x128xf32, #tpu.memory_space<vmem>>, vector<1x16x128xf32>,
    %c1_22 = arith.constant 1 : index
    %c0_23 = arith.constant 0 : index
    %c0_24 = arith.constant 0 : index
    %19 = vector.load %arg1[%c1_22, %c0_23, %c0_24] : memref<2x16x128xf32, #tpu.memory_space<vmem>>, vector<1x16x64xf32>
    %20 = vector.shape_cast %19 : vector<1x16x64xf32> to vector<16x64xf32>
    %c0_25 = arith.constant 0 : index
    %c0_26 = arith.constant 0 : index
    %c0_27 = arith.constant 0 : index
    %21 = vector.load %arg2[%c0_25, %c0_26, %c0_27] : memref<2x16x16xf32, #tpu.memory_space<vmem>>, vector<1x16x16xf32>
    %22 = vector.shape_cast %21 : vector<1x16x16xf32> to vector<16x16xf32>
    %cst_28 = arith.constant dense<0.000000e+00> : vector<16x64xf32>
    %23 = tpu.matmul %22, %20, %cst_28 {dimension_numbers = #tpu.dot_dimension_numbers<[1], [0], [0], [1], [0, 0, 1, 1], [], []>} : vector<16x16xf32>, vector<16x64xf32>, vector<16x64xf32> -> vector<16x64xf32>
    %c0_29 = arith.constant 0 : index
    %c0_30 = arith.constant 0 : index
    %24 = vector.load %arg4[%c0_29, %c0_30] : memref<16x128xf32, #tpu.memory_space<vmem>>, vector<16x64xf32>
    tpu.vector_store %arg4[%c0_29, %c0_30], %23 {strides = array<i32>} : memref<16x128xf32, #tpu.memory_space<vmem>>, vector<16x64xf32>,
    %c1_31 = arith.constant 1 : index
    %c0_32 = arith.constant 0 : index
    %c64_33 = arith.constant 64 : index
    %25 = vector.load %arg1[%c1_31, %c0_32, %c64_33] : memref<2x16x128xf32, #tpu.memory_space<vmem>>, vector<1x16x64xf32>
    %26 = vector.shape_cast %25 : vector<1x16x64xf32> to vector<16x64xf32>
    %c1_34 = arith.constant 1 : index
    %c0_35 = arith.constant 0 : index
    %c0_36 = arith.constant 0 : index
    %27 = vector.load %arg2[%c1_34, %c0_35, %c0_36] : memref<2x16x16xf32, #tpu.memory_space<vmem>>, vector<1x16x16xf32>
    %28 = vector.shape_cast %27 : vector<1x16x16xf32> to vector<16x16xf32>
    %cst_37 = arith.constant dense<0.000000e+00> : vector<16x64xf32>
    %29 = tpu.matmul %28, %26, %cst_37 {dimension_numbers = #tpu.dot_dimension_numbers<[1], [0], [0], [1], [0, 0, 1, 1], [], []>} : vector<16x16xf32>, vector<16x64xf32>, vector<16x64xf32> -> vector<16x64xf32>
    %c0_38 = arith.constant 0 : index
    %c64_39 = arith.constant 64 : index
    %30 = vector.load %arg4[%c0_38, %c64_39] : memref<16x128xf32, #tpu.memory_space<vmem>>, vector<16x64xf32>
    tpu.vector_store %arg4[%c0_38, %c64_39], %29 {strides = array<i32>} : memref<16x128xf32, #tpu.memory_space<vmem>>, vector<16x64xf32>,
    %c0_40 = arith.constant 0 : index
    %c0_41 = arith.constant 0 : index
    %31 = vector.load %arg4[%c0_40, %c0_41] : memref<16x128xf32, #tpu.memory_space<vmem>>, vector<16x128xf32>
    %c1_42 = arith.constant 1 : index
    %c0_43 = arith.constant 0 : index
    %c0_44 = arith.constant 0 : index
    %32 = vector.load %arg1[%c1_42, %c0_43, %c0_44] : memref<2x16x128xf32, #tpu.memory_space<vmem>>, vector<1x16x128xf32>
    %33 = vector.shape_cast %32 : vector<1x16x128xf32> to vector<16x128xf32>
    %34 = arith.addf %31, %33 : vector<16x128xf32>
    %c1_45 = arith.constant 1 : index
    %c0_46 = arith.constant 0 : index
    %c0_47 = arith.constant 0 : index
    %35 = vector.load %arg3[%c1_45, %c0_46, %c0_47] : memref<2x16x128xf32, #tpu.memory_space<vmem>>, vector<1x16x128xf32>
    %36 = vector.shape_cast %35 : vector<1x16x128xf32> to vector<16x128xf32>
    %37 = vector.shape_cast %34 : vector<16x128xf32> to vector<1x16x128xf32>
    tpu.vector_store %arg3[%c1_45, %c0_46, %c0_47], %37 {strides = array<i32>} : memref<2x16x128xf32, #tpu.memory_space<vmem>>, vector<1x16x128xf32>,
    return
  }
  func.func @transform_0(%arg0: i32) -> (i32, i32, i32) {
    %c0_i32 = arith.constant 0 : i32
    %c0_i32_0 = arith.constant 0 : i32
    %c0_i32_1 = arith.constant 0 : i32
    return %arg0, %c0_i32, %c0_i32_0 : i32, i32, i32
  }
  func.func @transform_1(%arg0: i32) -> (i32, i32, i32) {
    %c0_i32 = arith.constant 0 : i32
    %c0_i32_0 = arith.constant 0 : i32
    %c0_i32_1 = arith.constant 0 : i32
    %c0_i32_2 = arith.constant 0 : i32
    return %c0_i32, %c0_i32_0, %c0_i32_1 : i32, i32, i32
  }
  func.func @transform_2(%arg0: i32) -> (i32, i32, i32) {
    %c0_i32 = arith.constant 0 : i32
    %c0_i32_0 = arith.constant 0 : i32
    %c0_i32_1 = arith.constant 0 : i32
    return %arg0, %c0_i32, %c0_i32_0 : i32, i32, i32
  }
}

module attributes {stable_mosaic.version = 11 : i64} {
  func.func @_dense_mixer_kernel(%arg0: i32, %arg1: memref<2x16x128xf32, #tpu.memory_space<vmem>>, %arg2: memref<2x16x16xf32, #tpu.memory_space<vmem>>, %arg3: memref<2x16x128xf32, #tpu.memory_space<vmem>>, %arg4: memref<16x128xf32, #tpu.memory_space<vmem>>) attributes {dimension_semantics = [#tpu.dimension_semantics<parallel>], iteration_bounds = array<i64: 1>, scalar_prefetch = 0 : i64, scratch_operands = 1 : i64, tpu.core_type = #tpu.core_type<tc>, window_params = [{transform_indices = @transform_0, window_bounds = array<i64: 2, 16, 128>}, {pipeline_mode = #tpu.pipeline_mode<synchronous>, transform_indices = @transform_1, window_bounds = array<i64: 2, 16, 16>}, {transform_indices = @transform_2, window_bounds = array<i64: 2, 16, 128>}]} {
    %c0 = arith.constant 0 : index
    %c0_0 = arith.constant 0 : index
    %c0_1 = arith.constant 0 : index
    %0 = vector.load %arg1[%c0, %c0_0, %c0_1] : memref<2x16x128xf32, #tpu.memory_space<vmem>>, vector<1x16x64xf32>
    %1 = vector.shape_cast %0 : vector<1x16x64xf32> to vector<16x64xf32>
    %c0_2 = arith.constant 0 : index
    %c0_3 = arith.constant 0 : index
    %c0_4 = arith.constant 0 : index
    %2 = vector.load %arg2[%c0_2, %c0_3, %c0_4] : memref<2x16x16xf32, #tpu.memory_space<vmem>>, vector<1x16x16xf32>
    %3 = vector.shape_cast %2 : vector<1x16x16xf32> to vector<16x16xf32>
    %cst = arith.constant dense<0.000000e+00> : vector<16x64xf32>
    %4 = tpu.matmul %3, %1, %cst {dimension_numbers = #tpu.dot_dimension_numbers<[1], [0], [0], [1], [0, 0, 1, 1], [], []>} : vector<16x16xf32>, vector<16x64xf32>, vector<16x64xf32> -> vector<16x64xf32>
    %c0_5 = arith.constant 0 : index
    %c0_6 = arith.constant 0 : index
    %5 = vector.load %arg4[%c0_5, %c0_6] : memref<16x128xf32, #tpu.memory_space<vmem>>, vector<16x64xf32>
    tpu.vector_store %arg4[%c0_5, %c0_6], %4 {strides = array<i32>} : memref<16x128xf32, #tpu.memory_space<vmem>>, vector<16x64xf32>,
    %c0_7 = arith.constant 0 : index
    %c0_8 = arith.constant 0 : index
    %c64 = arith.constant 64 : index
    %6 = vector.load %arg1[%c0_7, %c0_8, %c64] : memref<2x16x128xf32, #tpu.memory_space<vmem>>, vector<1x16x64xf32>
    %7 = vector.shape_cast %6 : vector<1x16x64xf32> to vector<16x64xf32>
    %c1 = arith.constant 1 : index
    %c0_9 = arith.constant 0 : index
    %c0_10 = arith.constant 0 : index
    %8 = vector.load %arg2[%c1, %c0_9, %c0_10] : memref<2x16x16xf32, #tpu.memory_space<vmem>>, vector<1x16x16xf32>
    %9 = vector.shape_cast %8 : vector<1x16x16xf32> to vector<16x16xf32>
    %cst_11 = arith.constant dense<0.000000e+00> : vector<16x64xf32>
    %10 = tpu.matmul %9, %7, %cst_11 {dimension_numbers = #tpu.dot_dimension_numbers<[1], [0], [0], [1], [0, 0, 1, 1], [], []>} : vector<16x16xf32>, vector<16x64xf32>, vector<16x64xf32> -> vector<16x64xf32>
    %c0_12 = arith.constant 0 : index
    %c64_13 = arith.constant 64 : index
    %11 = vector.load %arg4[%c0_12, %c64_13] : memref<16x128xf32, #tpu.memory_space<vmem>>, vector<16x64xf32>
    tpu.vector_store %arg4[%c0_12, %c64_13], %10 {strides = array<i32>} : memref<16x128xf32, #tpu.memory_space<vmem>>, vector<16x64xf32>,
    %c0_14 = arith.constant 0 : index
    %c0_15 = arith.constant 0 : index
    %12 = vector.load %arg4[%c0_14, %c0_15] : memref<16x128xf32, #tpu.memory_space<vmem>>, vector<16x128xf32>
    %c0_16 = arith.constant 0 : index
    %c0_17 = arith.constant 0 : index
    %c0_18 = arith.constant 0 : index
    %13 = vector.load %arg1[%c0_16, %c0_17, %c0_18] : memref<2x16x128xf32, #tpu.memory_space<vmem>>, vector<1x16x128xf32>
    %14 = vector.shape_cast %13 : vector<1x16x128xf32> to vector<16x128xf32>
    %15 = arith.addf %12, %14 : vector<16x128xf32>
    %c0_19 = arith.constant 0 : index
    %c0_20 = arith.constant 0 : index
    %c0_21 = arith.constant 0 : index
    %16 = vector.load %arg3[%c0_19, %c0_20, %c0_21] : memref<2x16x128xf32, #tpu.memory_space<vmem>>, vector<1x16x128xf32>
    %17 = vector.shape_cast %16 : vector<1x16x128xf32> to vector<16x128xf32>
    %18 = vector.shape_cast %15 : vector<16x128xf32> to vector<1x16x128xf32>
    tpu.vector_store %arg3[%c0_19, %c0_20, %c0_21], %18 {strides = array<i32>} : memref<2x16x128xf32, #tpu.memory_space<vmem>>, vector<1x16x128xf32>,
    %c1_22 = arith.constant 1 : index
    %c0_23 = arith.constant 0 : index
    %c0_24 = arith.constant 0 : index
    %19 = vector.load %arg1[%c1_22, %c0_23, %c0_24] : memref<2x16x128xf32, #tpu.memory_space<vmem>>, vector<1x16x64xf32>
    %20 = vector.shape_cast %19 : vector<1x16x64xf32> to vector<16x64xf32>
    %c0_25 = arith.constant 0 : index
    %c0_26 = arith.constant 0 : index
    %c0_27 = arith.constant 0 : index
    %21 = vector.load %arg2[%c0_25, %c0_26, %c0_27] : memref<2x16x16xf32, #tpu.memory_space<vmem>>, vector<1x16x16xf32>
    %22 = vector.shape_cast %21 : vector<1x16x16xf32> to vector<16x16xf32>
    %cst_28 = arith.constant dense<0.000000e+00> : vector<16x64xf32>
    %23 = tpu.matmul %22, %20, %cst_28 {dimension_numbers = #tpu.dot_dimension_numbers<[1], [0], [0], [1], [0, 0, 1, 1], [], []>} : vector<16x16xf32>, vector<16x64xf32>, vector<16x64xf32> -> vector<16x64xf32>
    %c0_29 = arith.constant 0 : index
    %c0_30 = arith.constant 0 : index
    %24 = vector.load %arg4[%c0_29, %c0_30] : memref<16x128xf32, #tpu.memory_space<vmem>>, vector<16x64xf32>
    tpu.vector_store %arg4[%c0_29, %c0_30], %23 {strides = array<i32>} : memref<16x128xf32, #tpu.memory_space<vmem>>, vector<16x64xf32>,
    %c1_31 = arith.constant 1 : index
    %c0_32 = arith.constant 0 : index
    %c64_33 = arith.constant 64 : index
    %25 = vector.load %arg1[%c1_31, %c0_32, %c64_33] : memref<2x16x128xf32, #tpu.memory_space<vmem>>, vector<1x16x64xf32>
    %26 = vector.shape_cast %25 : vector<1x16x64xf32> to vector<16x64xf32>
    %c1_34 = arith.constant 1 : index
    %c0_35 = arith.constant 0 : index
    %c0_36 = arith.constant 0 : index
    %27 = vector.load %arg2[%c1_34, %c0_35, %c0_36] : memref<2x16x16xf32, #tpu.memory_space<vmem>>, vector<1x16x16xf32>
    %28 = vector.shape_cast %27 : vector<1x16x16xf32> to vector<16x16xf32>
    %cst_37 = arith.constant dense<0.000000e+00> : vector<16x64xf32>
    %29 = tpu.matmul %28, %26, %cst_37 {dimension_numbers = #tpu.dot_dimension_numbers<[1], [0], [0], [1], [0, 0, 1, 1], [], []>} : vector<16x16xf32>, vector<16x64xf32>, vector<16x64xf32> -> vector<16x64xf32>
    %c0_38 = arith.constant 0 : index
    %c64_39 = arith.constant 64 : index
    %30 = vector.load %arg4[%c0_38, %c64_39] : memref<16x128xf32, #tpu.memory_space<vmem>>, vector<16x64xf32>
    tpu.vector_store %arg4[%c0_38, %c64_39], %29 {strides = array<i32>} : memref<16x128xf32, #tpu.memory_space<vmem>>, vector<16x64xf32>,
    %c0_40 = arith.constant 0 : index
    %c0_41 = arith.constant 0 : index
    %31 = vector.load %arg4[%c0_40, %c0_41] : memref<16x128xf32, #tpu.memory_space<vmem>>, vector<16x128xf32>
    %c1_42 = arith.constant 1 : index
    %c0_43 = arith.constant 0 : index
    %c0_44 = arith.constant 0 : index
    %32 = vector.load %arg1[%c1_42, %c0_43, %c0_44] : memref<2x16x128xf32, #tpu.memory_space<vmem>>, vector<1x16x128xf32>
    %33 = vector.shape_cast %32 : vector<1x16x128xf32> to vector<16x128xf32>
    %34 = arith.addf %31, %33 : vector<16x128xf32>
    %c1_45 = arith.constant 1 : index
    %c0_46 = arith.constant 0 : index
    %c0_47 = arith.constant 0 : index
    %35 = vector.load %arg3[%c1_45, %c0_46, %c0_47] : memref<2x16x128xf32, #tpu.memory_space<vmem>>, vector<1x16x128xf32>
    %36 = vector.shape_cast %35 : vector<1x16x128xf32> to vector<16x128xf32>
    %37 = vector.shape_cast %34 : vector<16x128xf32> to vector<1x16x128xf32>
    tpu.vector_store %arg3[%c1_45, %c0_46, %c0_47], %37 {strides = array<i32>} : memref<2x16x128xf32, #tpu.memory_space<vmem>>, vector<1x16x128xf32>,
    return
  }
  func.func @transform_0(%arg0: i32) -> (i32, i32, i32) {
    %c0_i32 = arith.constant 0 : i32
    %c0_i32_0 = arith.constant 0 : i32
    %c0_i32_1 = arith.constant 0 : i32
    return %arg0, %c0_i32, %c0_i32_0 : i32, i32, i32
  }
  func.func @transform_1(%arg0: i32) -> (i32, i32, i32) {
    %c0_i32 = arith.constant 0 : i32
    %c0_i32_0 = arith.constant 0 : i32
    %c0_i32_1 = arith.constant 0 : i32
    %c0_i32_2 = arith.constant 0 : i32
    return %c0_i32, %c0_i32_0, %c0_i32_1 : i32, i32, i32
  }
  func.func @transform_2(%arg0: i32) -> (i32, i32, i32) {
    %c0_i32 = arith.constant 0 : i32
    %c0_i32_0 = arith.constant 0 : i32
    %c0_i32_1 = arith.constant 0 : i32
    return %arg0, %c0_i32, %c0_i32_0 : i32, i32, i32
  }
}

</mosaic_0001>

<llo_original>
// kernel: tpu_custom_call.1
$region0: #{tpu_custom_call.1}
  #allocation0 [shape = 'u32[]', space=smem, size = 0x4, offset = 0x4, fixed_abs, tag = 'smem constant byte address 0x4 - core index']
  #allocation1 [shape = 'u32[144,128]{1,0:T(1,128)}', space=vmem, size = 0x12000, scoped, tag = 'internal scratch']
  #allocation2 [shape = 'f32[16,128]{1,0:T(8,128)}', space=vmem, size = 0x2000, scoped, tag = 'scratch operand']
  %s0 = inlined_call_operand.hbm [shape: f32[2,16,128], index: 0, kind: input, shape index: {}]
  %s1 = inlined_call_operand.hbm [shape: f32[2,16,16], index: 1, kind: input, shape index: {}]
  %s2 = inlined_call_operand.hbm [shape: f32[2,16,128], index: 2, kind: output, shape index: {}]
  %s3 = sld [smem:[#allocation0]]
  $region26: #{tpu_custom_call.1} parent=0
    _
  %s5 = ssub.s32 1, %s3
  %s6 = scalar_select 0, %s5, %s3
  $region1: #{tpu_custom_call.1} parent=0
    #allocation3 [shape = 'u8[16384]{0}', space=vmem, size = 0x4000, scoped, tag = 'input window, operand 0, single buffered']
    #allocation4 [shape = 's32[1]{0}', space=sflag, size = 0x4, scoped, tag = 'scoped memory for tpu_custom_call.1']
    #allocation5 [shape = 's32[1]{0}', space=sflag, size = 0x4, scoped, tag = 'scoped memory for tpu_custom_call.1']
    #allocation6 [shape = 'u8[16384]{0}', space=vmem, size = 0x4000, scoped, tag = 'input window, operand 1, single buffered']
    #allocation7 [shape = 's32[1]{0}', space=sflag, size = 0x4, scoped, tag = 'scoped memory for tpu_custom_call.1']
    #allocation8 [shape = 'u8[16384]{0}', space=vmem, size = 0x4000, scoped, tag = 'output window, operand 0, single buffered']
    %7 = vsyncpa [#allocation4], 0
    %8 = vsyncpa [#allocation7], 0
    %9 = vsyncpa [#allocation5], 0
    // Predicated region
    $region2: #{tpu_custom_call.1} parent=1 // pred_check
      _
    $region3: #{tpu_custom_call.1} parent=1 // pred_check_branch
      %11 = sbr.rel (0) target = $region5
    $region4: #{tpu_custom_call.1} parent=1 // pred_region
      %s13 = ssub.s32 512, 512
      %14 = vsyncadd [#allocation4], %s13
      %s15 = sshll.u32 [#allocation3], 4
      %s16 = int_to_ptr.vmem [resolvable:$true] %s15
      %21 = dma.hbm_to_vmem [thread:$0]  %s0, 512, %s16, [#allocation4], 128, 128, 8
    $region5: #{tpu_custom_call.1} parent=1 // pred_fallthru
      _
    // Predicated region
    $region6: #{tpu_custom_call.1} parent=1 // pred_check
      _
    $region7: #{tpu_custom_call.1} parent=1 // pred_check_branch
      %23 = sbr.rel (0) target = $region9
    $region8: #{tpu_custom_call.1} parent=1 // pred_region
      %s25 = ssub.s32 512, 512
      %26 = vsyncadd [#allocation7], %s25
      %s27 = sshll.u32 [#allocation6], 4
      %s28 = int_to_ptr.vmem [resolvable:$true] %s27
      %33 = dma.hbm_to_vmem [thread:$0]  %s1, 512, %s28, [#allocation7], 128, 128, 8
    $region9: #{tpu_custom_call.1} parent=1 // pred_fallthru
      _
    // Predicated region
    $region10: #{tpu_custom_call.1} parent=1 // pred_check
      _
    $region11: #{tpu_custom_call.1} parent=1 // pred_check_branch
      %35 = sbr.rel (0) target = $region13
    $region12: #{tpu_custom_call.1} parent=1 // pred_region
      %36 = dma.done [#allocation4], 512
    $region13: #{tpu_custom_call.1} parent=1 // pred_fallthru
      _
    // Predicated region
    $region14: #{tpu_custom_call.1} parent=1 // pred_check
      _
    $region15: #{tpu_custom_call.1} parent=1 // pred_check_branch
      %38 = sbr.rel (0) target = $region17
    $region16: #{tpu_custom_call.1} parent=1 // pred_region
      %39 = dma.done [#allocation7], 512
    $region17: #{tpu_custom_call.1} parent=1 // pred_fallthru
      _
    %v40 = vld [vmem:[#allocation3] sm:$0xff]
    %v41 = vld [vmem:[#allocation3 + $0x8] sm:$0xff]
    %v42 = vld [vmem:[#allocation6] sm:$0xff]
    %v43 = vld [vmem:[#allocation6 + $0x8] sm:$0xff]
    %vm44 = vcmask 130048
    %v46 = vsel %vm44, %v42, 0
    %v49 = vsel %vm44, %v43, 0
    %51 = vmatprep.subr.mxu0 0.0
    %52 = vmatpush1.msra.mxu0 %v40
    %53 = vmatprep.subr.mxu0 0.0
    %54 = vmatpush1.msra.mxu0 %v41
    %55 = vmatprep.subr.mxu0 0.0
    %56 = vmatpush1.msra.mxu0 0.0
    %57 = vmatprep.subr.mxu0 0.0
    %58 = vmatpush1.msra.mxu0 0.0
    %59 = vmatprep.subr.mxu0 0.0
    %60 = vmatpush1.msra.mxu0 0.0
    %61 = vmatprep.subr.mxu0 0.0
    %62 = vmatpush1.msra.mxu0 0.0
    %63 = vmatprep.subr.mxu0 0.0
    %64 = vmatpush1.msra.mxu0 0.0
    %65 = vmatprep.subr.mxu0 0.0
    %66 = vmatpush1.msra.mxu0 0.0
    %67 = vmatprep.subr.mxu0 0.0
    %68 = vmatpush1.msra.mxu0 0.0
    %69 = vmatprep.subr.mxu0 0.0
    %70 = vmatpush1.msra.mxu0 0.0
    %71 = vmatprep.subr.mxu0 0.0
    %72 = vmatpush1.msra.mxu0 0.0
    %73 = vmatprep.subr.mxu0 0.0
    %74 = vmatpush1.msra.mxu0 0.0
    %75 = vmatprep.subr.mxu0 0.0
    %76 = vmatpush1.msra.mxu0 0.0
    %77 = vmatprep.subr.mxu0 0.0
    %78 = vmatpush1.msra.mxu0 0.0
    %79 = vmatprep.subr.mxu0 0.0
    %80 = vmatpush1.msra.mxu0 0.0
    %81 = vmatprep.subr.mxu0 0.0
    %82 = vmatpush1.msra.mxu0 0.0
    %83 = vmatprep.subr.mxu0 0.0
    %84 = vmatpush1.msra.mxu0 0.0
    %85 = vmatprep.subr.mxu0 0.0
    %86 = vmatpush1.msra.mxu0 0.0
    %87 = vmatprep.subr.mxu0 0.0
    %88 = vmatpush1.msra.mxu0 0.0
    %89 = vmatprep.subr.mxu0 0.0
    %90 = vmatpush1.msra.mxu0 0.0
    %91 = vmatprep.subr.mxu0 0.0
    %92 = vmatpush1.msra.mxu0 0.0
    %93 = vmatprep.subr.mxu0 0.0
    %94 = vmatpush1.msra.mxu0 0.0
    %95 = vmatprep.subr.mxu0 0.0
    %96 = vmatpush1.msra.mxu0 0.0
    %97 = vmatprep.subr.mxu0 0.0
    %98 = vmatpush1.msra.mxu0 0.0
    %99 = vmatprep.subr.mxu0 0.0
    %100 = vmatpush1.msra.mxu0 0.0
    %101 = vmatprep.subr.mxu0 0.0
    %102 = vmatpush1.msra.mxu0 0.0
    %103 = vmatprep.subr.mxu0 0.0
    %104 = vmatpush1.msra.mxu0 0.0
    %105 = vmatprep.subr.mxu0 0.0
    %106 = vmatpush1.msra.mxu0 0.0
    %107 = vmatprep.subr.mxu0 0.0
    %108 = vmatpush1.msra.mxu0 0.0
    %109 = vmatprep.subr.mxu0 0.0
    %110 = vmatpush1.msra.mxu0 0.0
    %111 = vmatprep.subr.mxu0 0.0
    %112 = vmatpush1.msra.mxu0 0.0
    %113 = vmatprep.subr.mxu0 0.0
    %114 = vmatpush1.msra.mxu0 0.0
    %115 = vmatprep.mubr.f32.mxu0 0.0
    %116 = vmatmul.mubr.f32.gmra.mrb[0].mxu0 %v46
    %v117 = vpop.f32.mrb[0].mxu0
    %v118 = vadd.f32 0.0, %v117
    %v119 = vpop.f32.mrb[0].mxu0
    %120 = vmatprep.mubr.f32.mxu0 0.0
    %121 = vmatmul.mubr.f32.gmra.mrb[0].mxu0 %v49
    %v122 = vpop.f32.mrb[0].mxu0
    %v123 = vadd.f32 0.0, %v122
    %v124 = vpop.f32.mrb[0].mxu0
    %125 = vdwg.mxu0
    %vm126 = vcmask 523264
    %127 = vst.msk [vmem:[#allocation2] sm:$0xff] %vm126, %v118
    %128 = vst.msk [vmem:[#allocation2 + $0x8] sm:$0xff] %vm126, %v123
    %v129 = vld [vmem:[#allocation3] sm:$0xff]
    %v130 = vld [vmem:[#allocation3 + $0x8] sm:$0xff]
    %s131 = scalar_lea.vmem [#allocation6], 16
    %v132 = vld [vmem:[%s131] sm:$0xff]
    %v133 = vld [vmem:[%s131 + $0x8] sm:$0xff]
    %136 = vrot.lane.b32.xlu0 %v129, 64
    %v137 = vpop.permute.xlu0 %136
    %138 = vrot.lane.b32.xlu0 %v130, 64
    %v139 = vpop.permute.xlu0 %138
    %v143 = vsel %vm44, %v132, 0
    %v146 = vsel %vm44, %v133, 0
    %148 = vmatprep.subr.mxu0 0.0
    %149 = vmatpush1.msra.mxu0 %v137
    %150 = vmatprep.subr.mxu0 0.0
    %151 = vmatpush1.msra.mxu0 %v139
    %152 = vmatprep.subr.mxu0 0.0
    %153 = vmatpush1.msra.mxu0 0.0
    %154 = vmatprep.subr.mxu0 0.0
    %155 = vmatpush1.msra.mxu0 0.0
    %156 = vmatprep.subr.mxu0 0.0
    %157 = vmatpush1.msra.mxu0 0.0
    %158 = vmatprep.subr.mxu0 0.0
    %159 = vmatpush1.msra.mxu0 0.0
    %160 = vmatprep.subr.mxu0 0.0
    %161 = vmatpush1.msra.mxu0 0.0
    %162 = vmatprep.subr.mxu0 0.0
    %163 = vmatpush1.msra.mxu0 0.0
    %164 = vmatprep.subr.mxu0 0.0
    %165 = vmatpush1.msra.mxu0 0.0
    %166 = vmatprep.subr.mxu0 0.0
    %167 = vmatpush1.msra.mxu0 0.0
    %168 = vmatprep.subr.mxu0 0.0
    %169 = vmatpush1.msra.mxu0 0.0
    %170 = vmatprep.subr.mxu0 0.0
    %171 = vmatpush1.msra.mxu0 0.0
    %172 = vmatprep.subr.mxu0 0.0
    %173 = vmatpush1.msra.mxu0 0.0
    %174 = vmatprep.subr.mxu0 0.0
    %175 = vmatpush1.msra.mxu0 0.0
    %176 = vmatprep.subr.mxu0 0.0
    %177 = vmatpush1.msra.mxu0 0.0
    %178 = vmatprep.subr.mxu0 0.0
    %179 = vmatpush1.msra.mxu0 0.0
    %180 = vmatprep.subr.mxu0 0.0
    %181 = vmatpush1.msra.mxu0 0.0
    %182 = vmatprep.subr.mxu0 0.0
    %183 = vmatpush1.msra.mxu0 0.0
    %184 = vmatprep.subr.mxu0 0.0
    %185 = vmatpush1.msra.mxu0 0.0
    %186 = vmatprep.subr.mxu0 0.0
    %187 = vmatpush1.msra.mxu0 0.0
    %188 = vmatprep.subr.mxu0 0.0
    %189 = vmatpush1.msra.mxu0 0.0
    %190 = vmatprep.subr.mxu0 0.0
    %191 = vmatpush1.msra.mxu0 0.0
    %192 = vmatprep.subr.mxu0 0.0
    %193 = vmatpush1.msra.mxu0 0.0
    %194 = vmatprep.subr.mxu0 0.0
    %195 = vmatpush1.msra.mxu0 0.0
    %196 = vmatprep.subr.mxu0 0.0
    %197 = vmatpush1.msra.mxu0 0.0
    %198 = vmatprep.subr.mxu0 0.0
    %199 = vmatpush1.msra.mxu0 0.0
    %200 = vmatprep.subr.mxu0 0.0
    %201 = vmatpush1.msra.mxu0 0.0
    %202 = vmatprep.subr.mxu0 0.0
    %203 = vmatpush1.msra.mxu0 0.0
    %204 = vmatprep.subr.mxu0 0.0
    %205 = vmatpush1.msra.mxu0 0.0
    %206 = vmatprep.subr.mxu0 0.0
    %207 = vmatpush1.msra.mxu0 0.0
    %208 = vmatprep.subr.mxu0 0.0
    %209 = vmatpush1.msra.mxu0 0.0
    %210 = vmatprep.subr.mxu0 0.0
    %211 = vmatpush1.msra.mxu0 0.0
    %212 = vmatprep.mubr.f32.mxu0 0.0
    %213 = vmatmul.mubr.f32.gmra.mrb[0].mxu0 %v143
    %v214 = vpop.f32.mrb[0].mxu0
    %v215 = vadd.f32 0.0, %v214
    %v216 = vpop.f32.mrb[0].mxu0
    %217 = vmatprep.mubr.f32.mxu0 0.0
    %218 = vmatmul.mubr.f32.gmra.mrb[0].mxu0 %v146
    %v219 = vpop.f32.mrb[0].mxu0
    %v220 = vadd.f32 0.0, %v219
    %v221 = vpop.f32.mrb[0].mxu0
    %222 = vdwg.mxu0
    %225 = vrot.lane.b32.xlu0 %v215, 64
    %v226 = vpop.permute.xlu0 %225
    %227 = vrot.lane.b32.xlu0 %v220, 64
    %v228 = vpop.permute.xlu0 %227
    %vm231 = vcmask 1048064
    %232 = vst.msk [vmem:[#allocation2] sm:$0xff] %vm231, %v226
    %233 = vst.msk [vmem:[#allocation2 + $0x8] sm:$0xff] %vm231, %v228
    %v234 = vld [vmem:[#allocation2] sm:$0xff]
    %v235 = vld [vmem:[#allocation2 + $0x8] sm:$0xff]
    %v236 = vld [vmem:[#allocation3] sm:$0xff]
    %v237 = vld [vmem:[#allocation3 + $0x8] sm:$0xff]
    %v238 = vadd.f32 %v234, %v236
    %v239 = vadd.f32 %v235, %v237
    %240 = vst [vmem:[#allocation8] sm:$0xff] %v238
    %241 = vst [vmem:[#allocation8 + $0x8] sm:$0xff] %v239
    %s242 = scalar_lea.vmem [#allocation3], 16
    %v243 = vld [vmem:[%s242] sm:$0xff]
    %v244 = vld [vmem:[%s242 + $0x8] sm:$0xff]
    %v245 = vld [vmem:[#allocation6] sm:$0xff]
    %v246 = vld [vmem:[#allocation6 + $0x8] sm:$0xff]
    %v248 = vsel %vm44, %v245, 0
    %v251 = vsel %vm44, %v246, 0
    %253 = vmatprep.subr.mxu0 0.0
    %254 = vmatpush1.msra.mxu0 %v243
    %255 = vmatprep.subr.mxu0 0.0
    %256 = vmatpush1.msra.mxu0 %v244
    %257 = vmatprep.subr.mxu0 0.0
    %258 = vmatpush1.msra.mxu0 0.0
    %259 = vmatprep.subr.mxu0 0.0
    %260 = vmatpush1.msra.mxu0 0.0
    %261 = vmatprep.subr.mxu0 0.0
    %262 = vmatpush1.msra.mxu0 0.0
    %263 = vmatprep.subr.mxu0 0.0
    %264 = vmatpush1.msra.mxu0 0.0
    %265 = vmatprep.subr.mxu0 0.0
    %266 = vmatpush1.msra.mxu0 0.0
    %267 = vmatprep.subr.mxu0 0.0
    %268 = vmatpush1.msra.mxu0 0.0
    %269 = vmatprep.subr.mxu0 0.0
    %270 = vmatpush1.msra.mxu0 0.0
    %271 = vmatprep.subr.mxu0 0.0
    %272 = vmatpush1.msra.mxu0 0.0
    %273 = vmatprep.subr.mxu0 0.0
    %274 = vmatpush1.msra.mxu0 0.0
    %275 = vmatprep.subr.mxu0 0.0
    %276 = vmatpush1.msra.mxu0 0.0
    %277 = vmatprep.subr.mxu0 0.0
    %278 = vmatpush1.msra.mxu0 0.0
    %279 = vmatprep.subr.mxu0 0.0
    %280 = vmatpush1.msra.mxu0 0.0
    %281 = vmatprep.subr.mxu0 0.0
    %282 = vmatpush1.msra.mxu0 0.0
    %283 = vmatprep.subr.mxu0 0.0
    %284 = vmatpush1.msra.mxu0 0.0
    %285 = vmatprep.subr.mxu0 0.0
    %286 = vmatpush1.msra.mxu0 0.0
    %287 = vmatprep.subr.mxu0 0.0
    %288 = vmatpush1.msra.mxu0 0.0
    %289 = vmatprep.subr.mxu0 0.0
    %290 = vmatpush1.msra.mxu0 0.0
    %291 = vmatprep.subr.mxu0 0.0
    %292 = vmatpush1.msra.mxu0 0.0
    %293 = vmatprep.subr.mxu0 0.0
    %294 = vmatpush1.msra.mxu0 0.0
    %295 = vmatprep.subr.mxu0 0.0
    %296 = vmatpush1.msra.mxu0 0.0
    %297 = vmatprep.subr.mxu0 0.0
    %298 = vmatpush1.msra.mxu0 0.0
    %299 = vmatprep.subr.mxu0 0.0
    %300 = vmatpush1.msra.mxu0 0.0
    %301 = vmatprep.subr.mxu0 0.0
    %302 = vmatpush1.msra.mxu0 0.0
    %303 = vmatprep.subr.mxu0 0.0
    %304 = vmatpush1.msra.mxu0 0.0
    %305 = vmatprep.subr.mxu0 0.0
    %306 = vmatpush1.msra.mxu0 0.0
    %307 = vmatprep.subr.mxu0 0.0
    %308 = vmatpush1.msra.mxu0 0.0
    %309 = vmatprep.subr.mxu0 0.0
    %310 = vmatpush1.msra.mxu0 0.0
    %311 = vmatprep.subr.mxu0 0.0
    %312 = vmatpush1.msra.mxu0 0.0
    %313 = vmatprep.subr.mxu0 0.0
    %314 = vmatpush1.msra.mxu0 0.0
    %315 = vmatprep.subr.mxu0 0.0
    %316 = vmatpush1.msra.mxu0 0.0
    %317 = vmatprep.mubr.f32.mxu0 0.0
    %318 = vmatmul.mubr.f32.gmra.mrb[0].mxu0 %v248
    %v319 = vpop.f32.mrb[0].mxu0
    %v320 = vadd.f32 0.0, %v319
    %v321 = vpop.f32.mrb[0].mxu0
    %322 = vmatprep.mubr.f32.mxu0 0.0
    %323 = vmatmul.mubr.f32.gmra.mrb[0].mxu0 %v251
    %v324 = vpop.f32.mrb[0].mxu0
    %v325 = vadd.f32 0.0, %v324
    %v326 = vpop.f32.mrb[0].mxu0
    %327 = vdwg.mxu0
    %328 = vst.msk [vmem:[#allocation2] sm:$0xff] %vm126, %v320
    %329 = vst.msk [vmem:[#allocation2 + $0x8] sm:$0xff] %vm126, %v325
    %v330 = vld [vmem:[%s242] sm:$0xff]
    %v331 = vld [vmem:[%s242 + $0x8] sm:$0xff]
    %v332 = vld [vmem:[%s131] sm:$0xff]
    %v333 = vld [vmem:[%s131 + $0x8] sm:$0xff]
    %336 = vrot.lane.b32.xlu0 %v330, 64
    %v337 = vpop.permute.xlu0 %336
    %338 = vrot.lane.b32.xlu0 %v331, 64
    %v339 = vpop.permute.xlu0 %338
    %v343 = vsel %vm44, %v332, 0
    %v346 = vsel %vm44, %v333, 0
    %348 = vmatprep.subr.mxu0 0.0
    %349 = vmatpush1.msra.mxu0 %v337
    %350 = vmatprep.subr.mxu0 0.0
    %351 = vmatpush1.msra.mxu0 %v339
    %352 = vmatprep.subr.mxu0 0.0
    %353 = vmatpush1.msra.mxu0 0.0
    %354 = vmatprep.subr.mxu0 0.0
    %355 = vmatpush1.msra.mxu0 0.0
    %356 = vmatprep.subr.mxu0 0.0
    %357 = vmatpush1.msra.mxu0 0.0
    %358 = vmatprep.subr.mxu0 0.0
    %359 = vmatpush1.msra.mxu0 0.0
    %360 = vmatprep.subr.mxu0 0.0
    %361 = vmatpush1.msra.mxu0 0.0
    %362 = vmatprep.subr.mxu0 0.0
    %363 = vmatpush1.msra.mxu0 0.0
    %364 = vmatprep.subr.mxu0 0.0
    %365 = vmatpush1.msra.mxu0 0.0
    %366 = vmatprep.subr.mxu0 0.0
    %367 = vmatpush1.msra.mxu0 0.0
    %368 = vmatprep.subr.mxu0 0.0
    %369 = vmatpush1.msra.mxu0 0.0
    %370 = vmatprep.subr.mxu0 0.0
    %371 = vmatpush1.msra.mxu0 0.0
    %372 = vmatprep.subr.mxu0 0.0
    %373 = vmatpush1.msra.mxu0 0.0
    %374 = vmatprep.subr.mxu0 0.0
    %375 = vmatpush1.msra.mxu0 0.0
    %376 = vmatprep.subr.mxu0 0.0
    %377 = vmatpush1.msra.mxu0 0.0
    %378 = vmatprep.subr.mxu0 0.0
    %379 = vmatpush1.msra.mxu0 0.0
    %380 = vmatprep.subr.mxu0 0.0
    %381 = vmatpush1.msra.mxu0 0.0
    %382 = vmatprep.subr.mxu0 0.0
    %383 = vmatpush1.msra.mxu0 0.0
    %384 = vmatprep.subr.mxu0 0.0
    %385 = vmatpush1.msra.mxu0 0.0
    %386 = vmatprep.subr.mxu0 0.0
    %387 = vmatpush1.msra.mxu0 0.0
    %388 = vmatprep.subr.mxu0 0.0
    %389 = vmatpush1.msra.mxu0 0.0
    %390 = vmatprep.subr.mxu0 0.0
    %391 = vmatpush1.msra.mxu0 0.0
    %392 = vmatprep.subr.mxu0 0.0
    %393 = vmatpush1.msra.mxu0 0.0
    %394 = vmatprep.subr.mxu0 0.0
    %395 = vmatpush1.msra.mxu0 0.0
    %396 = vmatprep.subr.mxu0 0.0
    %397 = vmatpush1.msra.mxu0 0.0
    %398 = vmatprep.subr.mxu0 0.0
    %399 = vmatpush1.msra.mxu0 0.0
    %400 = vmatprep.subr.mxu0 0.0
    %401 = vmatpush1.msra.mxu0 0.0
    %402 = vmatprep.subr.mxu0 0.0
    %403 = vmatpush1.msra.mxu0 0.0
    %404 = vmatprep.subr.mxu0 0.0
    %405 = vmatpush1.msra.mxu0 0.0
    %406 = vmatprep.subr.mxu0 0.0
    %407 = vmatpush1.msra.mxu0 0.0
    %408 = vmatprep.subr.mxu0 0.0
    %409 = vmatpush1.msra.mxu0 0.0
    %410 = vmatprep.subr.mxu0 0.0
    %411 = vmatpush1.msra.mxu0 0.0
    %412 = vmatprep.mubr.f32.mxu0 0.0
    %413 = vmatmul.mubr.f32.gmra.mrb[0].mxu0 %v343
    %v414 = vpop.f32.mrb[0].mxu0
    %v415 = vadd.f32 0.0, %v414
    %v416 = vpop.f32.mrb[0].mxu0
    %417 = vmatprep.mubr.f32.mxu0 0.0
    %418 = vmatmul.mubr.f32.gmra.mrb[0].mxu0 %v346
    %v419 = vpop.f32.mrb[0].mxu0
    %v420 = vadd.f32 0.0, %v419
    %v421 = vpop.f32.mrb[0].mxu0
    %422 = vdwg.mxu0
    %425 = vrot.lane.b32.xlu0 %v415, 64
    %v426 = vpop.permute.xlu0 %425
    %427 = vrot.lane.b32.xlu0 %v420, 64
    %v428 = vpop.permute.xlu0 %427
    %431 = vst.msk [vmem:[#allocation2] sm:$0xff] %vm231, %v426
    %432 = vst.msk [vmem:[#allocation2 + $0x8] sm:$0xff] %vm231, %v428
    %v433 = vld [vmem:[#allocation2] sm:$0xff]
    %v434 = vld [vmem:[#allocation2 + $0x8] sm:$0xff]
    %v435 = vld [vmem:[%s242] sm:$0xff]
    %v436 = vld [vmem:[%s242 + $0x8] sm:$0xff]
    %v437 = vadd.f32 %v433, %v435
    %v438 = vadd.f32 %v434, %v436
    %s439 = scalar_lea.vmem [#allocation8], 16
    %440 = vst [vmem:[%s439] sm:$0xff] %v437
    %441 = vst [vmem:[%s439 + $0x8] sm:$0xff] %v438
    // Predicated region
    $region18: #{tpu_custom_call.1} parent=1 // pred_check
      _
    $region19: #{tpu_custom_call.1} parent=1 // pred_check_branch
      %443 = sbr.rel (0) target = $region21
    $region20: #{tpu_custom_call.1} parent=1 // pred_region
      %s445 = ssub.s32 512, 512
      %446 = vsyncadd [#allocation5], %s445
      %s447 = sshll.u32 [#allocation8], 4
      %s448 = int_to_ptr.vmem [resolvable:$true] %s447
      %453 = dma.vmem_to_hbm [thread:$0]  %s448, 512, %s2, [#allocation5], 128, 128, 8
    $region21: #{tpu_custom_call.1} parent=1 // pred_fallthru
      _
    // Predicated region
    $region22: #{tpu_custom_call.1} parent=1 // pred_check
      _
    $region23: #{tpu_custom_call.1} parent=1 // pred_check_branch
      %455 = sbr.rel (0) target = $region25
    $region24: #{tpu_custom_call.1} parent=1 // pred_region
      %456 = dma.done [#allocation5], 512
    $region25: #{tpu_custom_call.1} parent=1 // pred_fallthru
      _
    %457 = vsyncpa [#allocation4], 1
    %458 = vsyncpa [#allocation7], 1
    %459 = vsyncpa [#allocation5], 1

// kernel: tpu_custom_call.1
$region0: #{tpu_custom_call.1}
  #allocation0 [shape = 'u32[]', space=smem, size = 0x4, offset = 0x4, fixed_abs, tag = 'smem constant byte address 0x4 - core index']
  #allocation1 [shape = 'u32[144,128]{1,0:T(1,128)}', space=vmem, size = 0x12000, scoped, tag = 'internal scratch']
  #allocation2 [shape = 'f32[16,128]{1,0:T(8,128)}', space=vmem, size = 0x2000, scoped, tag = 'scratch operand']
  %s0 = inlined_call_operand.hbm [shape: f32[2,16,128], index: 0, kind: input, shape index: {}]
  %s1 = inlined_call_operand.hbm [shape: f32[2,16,16], index: 1, kind: input, shape index: {}]
  %s2 = inlined_call_operand.hbm [shape: f32[2,16,128], index: 2, kind: output, shape index: {}]
  %s3 = sld [smem:[#allocation0]]
  $region26: #{tpu_custom_call.1} parent=0
    _
  %s5 = ssub.s32 1, %s3
  %s6 = scalar_select 0, %s5, %s3
  $region1: #{tpu_custom_call.1} parent=0
    #allocation3 [shape = 'u8[16384]{0}', space=vmem, size = 0x4000, scoped, tag = 'input window, operand 0, single buffered']
    #allocation4 [shape = 's32[1]{0}', space=sflag, size = 0x4, scoped, tag = 'scoped memory for tpu_custom_call.1']
    #allocation5 [shape = 's32[1]{0}', space=sflag, size = 0x4, scoped, tag = 'scoped memory for tpu_custom_call.1']
    #allocation6 [shape = 'u8[16384]{0}', space=vmem, size = 0x4000, scoped, tag = 'input window, operand 1, single buffered']
    #allocation7 [shape = 's32[1]{0}', space=sflag, size = 0x4, scoped, tag = 'scoped memory for tpu_custom_call.1']
    #allocation8 [shape = 'u8[16384]{0}', space=vmem, size = 0x4000, scoped, tag = 'output window, operand 0, single buffered']
    %7 = vsyncpa [#allocation4], 0
    %8 = vsyncpa [#allocation7], 0
    %9 = vsyncpa [#allocation5], 0
    // Predicated region
    $region2: #{tpu_custom_call.1} parent=1 // pred_check
      _
    $region3: #{tpu_custom_call.1} parent=1 // pred_check_branch
      %11 = sbr.rel (0) target = $region5
    $region4: #{tpu_custom_call.1} parent=1 // pred_region
      %s13 = ssub.s32 512, 512
      %14 = vsyncadd [#allocation4], %s13
      %s15 = sshll.u32 [#allocation3], 4
      %s16 = int_to_ptr.vmem [resolvable:$true] %s15
      %21 = dma.hbm_to_vmem [thread:$0]  %s0, 512, %s16, [#allocation4], 128, 128, 8
    $region5: #{tpu_custom_call.1} parent=1 // pred_fallthru
      _
    // Predicated region
    $region6: #{tpu_custom_call.1} parent=1 // pred_check
      _
    $region7: #{tpu_custom_call.1} parent=1 // pred_check_branch
      %23 = sbr.rel (0) target = $region9
    $region8: #{tpu_custom_call.1} parent=1 // pred_region
      %s25 = ssub.s32 512, 512
      %26 = vsyncadd [#allocation7], %s25
      %s27 = sshll.u32 [#allocation6], 4
      %s28 = int_to_ptr.vmem [resolvable:$true] %s27
      %33 = dma.hbm_to_vmem [thread:$0]  %s1, 512, %s28, [#allocation7], 128, 128, 8
    $region9: #{tpu_custom_call.1} parent=1 // pred_fallthru
      _
    // Predicated region
    $region10: #{tpu_custom_call.1} parent=1 // pred_check
      _
    $region11: #{tpu_custom_call.1} parent=1 // pred_check_branch
      %35 = sbr.rel (0) target = $region13
    $region12: #{tpu_custom_call.1} parent=1 // pred_region
      %36 = dma.done [#allocation4], 512
    $region13: #{tpu_custom_call.1} parent=1 // pred_fallthru
      _
    // Predicated region
    $region14: #{tpu_custom_call.1} parent=1 // pred_check
      _
    $region15: #{tpu_custom_call.1} parent=1 // pred_check_branch
      %38 = sbr.rel (0) target = $region17
    $region16: #{tpu_custom_call.1} parent=1 // pred_region
      %39 = dma.done [#allocation7], 512
    $region17: #{tpu_custom_call.1} parent=1 // pred_fallthru
      _
    %v40 = vld [vmem:[#allocation3] sm:$0xff]
    %v41 = vld [vmem:[#allocation3 + $0x8] sm:$0xff]
    %v42 = vld [vmem:[#allocation6] sm:$0xff]
    %v43 = vld [vmem:[#allocation6 + $0x8] sm:$0xff]
    %vm44 = vcmask 130048
    %v46 = vsel %vm44, %v42, 0
    %v49 = vsel %vm44, %v43, 0
    %51 = vmatprep.subr.mxu0 0.0
    %52 = vmatpush1.msra.mxu0 %v40
    %53 = vmatprep.subr.mxu0 0.0
    %54 = vmatpush1.msra.mxu0 %v41
    %55 = vmatprep.subr.mxu0 0.0
    %56 = vmatpush1.msra.mxu0 0.0
    %57 = vmatprep.subr.mxu0 0.0
    %58 = vmatpush1.msra.mxu0 0.0
    %59 = vmatprep.subr.mxu0 0.0
    %60 = vmatpush1.msra.mxu0 0.0
    %61 = vmatprep.subr.mxu0 0.0
    %62 = vmatpush1.msra.mxu0 0.0
    %63 = vmatprep.subr.mxu0 0.0
    %64 = vmatpush1.msra.mxu0 0.0
    %65 = vmatprep.subr.mxu0 0.0
    %66 = vmatpush1.msra.mxu0 0.0
    %67 = vmatprep.subr.mxu0 0.0
    %68 = vmatpush1.msra.mxu0 0.0
    %69 = vmatprep.subr.mxu0 0.0
    %70 = vmatpush1.msra.mxu0 0.0
    %71 = vmatprep.subr.mxu0 0.0
    %72 = vmatpush1.msra.mxu0 0.0
    %73 = vmatprep.subr.mxu0 0.0
    %74 = vmatpush1.msra.mxu0 0.0
    %75 = vmatprep.subr.mxu0 0.0
    %76 = vmatpush1.msra.mxu0 0.0
    %77 = vmatprep.subr.mxu0 0.0
    %78 = vmatpush1.msra.mxu0 0.0
    %79 = vmatprep.subr.mxu0 0.0
    %80 = vmatpush1.msra.mxu0 0.0
    %81 = vmatprep.subr.mxu0 0.0
    %82 = vmatpush1.msra.mxu0 0.0
    %83 = vmatprep.subr.mxu0 0.0
    %84 = vmatpush1.msra.mxu0 0.0
    %85 = vmatprep.subr.mxu0 0.0
    %86 = vmatpush1.msra.mxu0 0.0
    %87 = vmatprep.subr.mxu0 0.0
    %88 = vmatpush1.msra.mxu0 0.0
    %89 = vmatprep.subr.mxu0 0.0
    %90 = vmatpush1.msra.mxu0 0.0
    %91 = vmatprep.subr.mxu0 0.0
    %92 = vmatpush1.msra.mxu0 0.0
    %93 = vmatprep.subr.mxu0 0.0
    %94 = vmatpush1.msra.mxu0 0.0
    %95 = vmatprep.subr.mxu0 0.0
    %96 = vmatpush1.msra.mxu0 0.0
    %97 = vmatprep.subr.mxu0 0.0
    %98 = vmatpush1.msra.mxu0 0.0
    %99 = vmatprep.subr.mxu0 0.0
    %100 = vmatpush1.msra.mxu0 0.0
    %101 = vmatprep.subr.mxu0 0.0
    %102 = vmatpush1.msra.mxu0 0.0
    %103 = vmatprep.subr.mxu0 0.0
    %104 = vmatpush1.msra.mxu0 0.0
    %105 = vmatprep.subr.mxu0 0.0
    %106 = vmatpush1.msra.mxu0 0.0
    %107 = vmatprep.subr.mxu0 0.0
    %108 = vmatpush1.msra.mxu0 0.0
    %109 = vmatprep.subr.mxu0 0.0
    %110 = vmatpush1.msra.mxu0 0.0
    %111 = vmatprep.subr.mxu0 0.0
    %112 = vmatpush1.msra.mxu0 0.0
    %113 = vmatprep.subr.mxu0 0.0
    %114 = vmatpush1.msra.mxu0 0.0
    %115 = vmatprep.mubr.f32.mxu0 0.0
    %116 = vmatmul.mubr.f32.gmra.mrb[0].mxu0 %v46
    %v117 = vpop.f32.mrb[0].mxu0
    %v118 = vadd.f32 0.0, %v117
    %v119 = vpop.f32.mrb[0].mxu0
    %120 = vmatprep.mubr.f32.mxu0 0.0
    %121 = vmatmul.mubr.f32.gmra.mrb[0].mxu0 %v49
    %v122 = vpop.f32.mrb[0].mxu0
    %v123 = vadd.f32 0.0, %v122
    %v124 = vpop.f32.mrb[0].mxu0
    %125 = vdwg.mxu0
    %vm126 = vcmask 523264
    %127 = vst.msk [vmem:[#allocation2] sm:$0xff] %vm126, %v118
    %128 = vst.msk [vmem:[#allocation2 + $0x8] sm:$0xff] %vm126, %v123
    %v129 = vld [vmem:[#allocation3] sm:$0xff]
    %v130 = vld [vmem:[#allocation3 + $0x8] sm:$0xff]
    %s131 = scalar_lea.vmem [#allocation6], 16
    %v132 = vld [vmem:[%s131] sm:$0xff]
    %v133 = vld [vmem:[%s131 + $0x8] sm:$0xff]
    %136 = vrot.lane.b32.xlu0 %v129, 64
    %v137 = vpop.permute.xlu0 %136
    %138 = vrot.lane.b32.xlu0 %v130, 64
    %v139 = vpop.permute.xlu0 %138
    %v143 = vsel %vm44, %v132, 0
    %v146 = vsel %vm44, %v133, 0
    %148 = vmatprep.subr.mxu0 0.0
    %149 = vmatpush1.msra.mxu0 %v137
    %150 = vmatprep.subr.mxu0 0.0
    %151 = vmatpush1.msra.mxu0 %v139
    %152 = vmatprep.subr.mxu0 0.0
    %153 = vmatpush1.msra.mxu0 0.0
    %154 = vmatprep.subr.mxu0 0.0
    %155 = vmatpush1.msra.mxu0 0.0
    %156 = vmatprep.subr.mxu0 0.0
    %157 = vmatpush1.msra.mxu0 0.0
    %158 = vmatprep.subr.mxu0 0.0
    %159 = vmatpush1.msra.mxu0 0.0
    %160 = vmatprep.subr.mxu0 0.0
    %161 = vmatpush1.msra.mxu0 0.0
    %162 = vmatprep.subr.mxu0 0.0
    %163 = vmatpush1.msra.mxu0 0.0
    %164 = vmatprep.subr.mxu0 0.0
    %165 = vmatpush1.msra.mxu0 0.0
    %166 = vmatprep.subr.mxu0 0.0
    %167 = vmatpush1.msra.mxu0 0.0
    %168 = vmatprep.subr.mxu0 0.0
    %169 = vmatpush1.msra.mxu0 0.0
    %170 = vmatprep.subr.mxu0 0.0
    %171 = vmatpush1.msra.mxu0 0.0
    %172 = vmatprep.subr.mxu0 0.0
    %173 = vmatpush1.msra.mxu0 0.0
    %174 = vmatprep.subr.mxu0 0.0
    %175 = vmatpush1.msra.mxu0 0.0
    %176 = vmatprep.subr.mxu0 0.0
    %177 = vmatpush1.msra.mxu0 0.0
    %178 = vmatprep.subr.mxu0 0.0
    %179 = vmatpush1.msra.mxu0 0.0
    %180 = vmatprep.subr.mxu0 0.0
    %181 = vmatpush1.msra.mxu0 0.0
    %182 = vmatprep.subr.mxu0 0.0
    %183 = vmatpush1.msra.mxu0 0.0
    %184 = vmatprep.subr.mxu0 0.0
    %185 = vmatpush1.msra.mxu0 0.0
    %186 = vmatprep.subr.mxu0 0.0
    %187 = vmatpush1.msra.mxu0 0.0
    %188 = vmatprep.subr.mxu0 0.0
    %189 = vmatpush1.msra.mxu0 0.0
    %190 = vmatprep.subr.mxu0 0.0
    %191 = vmatpush1.msra.mxu0 0.0
    %192 = vmatprep.subr.mxu0 0.0
    %193 = vmatpush1.msra.mxu0 0.0
    %194 = vmatprep.subr.mxu0 0.0
    %195 = vmatpush1.msra.mxu0 0.0
    %196 = vmatprep.subr.mxu0 0.0
    %197 = vmatpush1.msra.mxu0 0.0
    %198 = vmatprep.subr.mxu0 0.0
    %199 = vmatpush1.msra.mxu0 0.0
    %200 = vmatprep.subr.mxu0 0.0
    %201 = vmatpush1.msra.mxu0 0.0
    %202 = vmatprep.subr.mxu0 0.0
    %203 = vmatpush1.msra.mxu0 0.0
    %204 = vmatprep.subr.mxu0 0.0
    %205 = vmatpush1.msra.mxu0 0.0
    %206 = vmatprep.subr.mxu0 0.0
    %207 = vmatpush1.msra.mxu0 0.0
    %208 = vmatprep.subr.mxu0 0.0
    %209 = vmatpush1.msra.mxu0 0.0
    %210 = vmatprep.subr.mxu0 0.0
    %211 = vmatpush1.msra.mxu0 0.0
    %212 = vmatprep.mubr.f32.mxu0 0.0
    %213 = vmatmul.mubr.f32.gmra.mrb[0].mxu0 %v143
    %v214 = vpop.f32.mrb[0].mxu0
    %v215 = vadd.f32 0.0, %v214
    %v216 = vpop.f32.mrb[0].mxu0
    %217 = vmatprep.mubr.f32.mxu0 0.0
    %218 = vmatmul.mubr.f32.gmra.mrb[0].mxu0 %v146
    %v219 = vpop.f32.mrb[0].mxu0
    %v220 = vadd.f32 0.0, %v219
    %v221 = vpop.f32.mrb[0].mxu0
    %222 = vdwg.mxu0
    %225 = vrot.lane.b32.xlu0 %v215, 64
    %v226 = vpop.permute.xlu0 %225
    %227 = vrot.lane.b32.xlu0 %v220, 64
    %v228 = vpop.permute.xlu0 %227
    %vm231 = vcmask 1048064
    %232 = vst.msk [vmem:[#allocation2] sm:$0xff] %vm231, %v226
    %233 = vst.msk [vmem:[#allocation2 + $0x8] sm:$0xff] %vm231, %v228
    %v234 = vld [vmem:[#allocation2] sm:$0xff]
    %v235 = vld [vmem:[#allocation2 + $0x8] sm:$0xff]
    %v236 = vld [vmem:[#allocation3] sm:$0xff]
    %v237 = vld [vmem:[#allocation3 + $0x8] sm:$0xff]
    %v238 = vadd.f32 %v234, %v236
    %v239 = vadd.f32 %v235, %v237
    %240 = vst [vmem:[#allocation8] sm:$0xff] %v238
    %241 = vst [vmem:[#allocation8 + $0x8] sm:$0xff] %v239
    %s242 = scalar_lea.vmem [#allocation3], 16
    %v243 = vld [vmem:[%s242] sm:$0xff]
    %v244 = vld [vmem:[%s242 + $0x8] sm:$0xff]
    %v245 = vld [vmem:[#allocation6] sm:$0xff]
    %v246 = vld [vmem:[#allocation6 + $0x8] sm:$0xff]
    %v248 = vsel %vm44, %v245, 0
    %v251 = vsel %vm44, %v246, 0
    %253 = vmatprep.subr.mxu0 0.0
    %254 = vmatpush1.msra.mxu0 %v243
    %255 = vmatprep.subr.mxu0 0.0
    %256 = vmatpush1.msra.mxu0 %v244
    %257 = vmatprep.subr.mxu0 0.0
    %258 = vmatpush1.msra.mxu0 0.0
    %259 = vmatprep.subr.mxu0 0.0
    %260 = vmatpush1.msra.mxu0 0.0
    %261 = vmatprep.subr.mxu0 0.0
    %262 = vmatpush1.msra.mxu0 0.0
    %263 = vmatprep.subr.mxu0 0.0
    %264 = vmatpush1.msra.mxu0 0.0
    %265 = vmatprep.subr.mxu0 0.0
    %266 = vmatpush1.msra.mxu0 0.0
    %267 = vmatprep.subr.mxu0 0.0
    %268 = vmatpush1.msra.mxu0 0.0
    %269 = vmatprep.subr.mxu0 0.0
    %270 = vmatpush1.msra.mxu0 0.0
    %271 = vmatprep.subr.mxu0 0.0
    %272 = vmatpush1.msra.mxu0 0.0
    %273 = vmatprep.subr.mxu0 0.0
    %274 = vmatpush1.msra.mxu0 0.0
    %275 = vmatprep.subr.mxu0 0.0
    %276 = vmatpush1.msra.mxu0 0.0
    %277 = vmatprep.subr.mxu0 0.0
    %278 = vmatpush1.msra.mxu0 0.0
    %279 = vmatprep.subr.mxu0 0.0
    %280 = vmatpush1.msra.mxu0 0.0
    %281 = vmatprep.subr.mxu0 0.0
    %282 = vmatpush1.msra.mxu0 0.0
    %283 = vmatprep.subr.mxu0 0.0
    %284 = vmatpush1.msra.mxu0 0.0
    %285 = vmatprep.subr.mxu0 0.0
    %286 = vmatpush1.msra.mxu0 0.0
    %287 = vmatprep.subr.mxu0 0.0
    %288 = vmatpush1.msra.mxu0 0.0
    %289 = vmatprep.subr.mxu0 0.0
    %290 = vmatpush1.msra.mxu0 0.0
    %291 = vmatprep.subr.mxu0 0.0
    %292 = vmatpush1.msra.mxu0 0.0
    %293 = vmatprep.subr.mxu0 0.0
    %294 = vmatpush1.msra.mxu0 0.0
    %295 = vmatprep.subr.mxu0 0.0
    %296 = vmatpush1.msra.mxu0 0.0
    %297 = vmatprep.subr.mxu0 0.0
    %298 = vmatpush1.msra.mxu0 0.0
    %299 = vmatprep.subr.mxu0 0.0
    %300 = vmatpush1.msra.mxu0 0.0
    %301 = vmatprep.subr.mxu0 0.0
    %302 = vmatpush1.msra.mxu0 0.0
    %303 = vmatprep.subr.mxu0 0.0
    %304 = vmatpush1.msra.mxu0 0.0
    %305 = vmatprep.subr.mxu0 0.0
    %306 = vmatpush1.msra.mxu0 0.0
    %307 = vmatprep.subr.mxu0 0.0
    %308 = vmatpush1.msra.mxu0 0.0
    %309 = vmatprep.subr.mxu0 0.0
    %310 = vmatpush1.msra.mxu0 0.0
    %311 = vmatprep.subr.mxu0 0.0
    %312 = vmatpush1.msra.mxu0 0.0
    %313 = vmatprep.subr.mxu0 0.0
    %314 = vmatpush1.msra.mxu0 0.0
    %315 = vmatprep.subr.mxu0 0.0
    %316 = vmatpush1.msra.mxu0 0.0
    %317 = vmatprep.mubr.f32.mxu0 0.0
    %318 = vmatmul.mubr.f32.gmra.mrb[0].mxu0 %v248
    %v319 = vpop.f32.mrb[0].mxu0
    %v320 = vadd.f32 0.0, %v319
    %v321 = vpop.f32.mrb[0].mxu0
    %322 = vmatprep.mubr.f32.mxu0 0.0
    %323 = vmatmul.mubr.f32.gmra.mrb[0].mxu0 %v251
    %v324 = vpop.f32.mrb[0].mxu0
    %v325 = vadd.f32 0.0, %v324
    %v326 = vpop.f32.mrb[0].mxu0
    %327 = vdwg.mxu0
    %328 = vst.msk [vmem:[#allocation2] sm:$0xff] %vm126, %v320
    %329 = vst.msk [vmem:[#allocation2 + $0x8] sm:$0xff] %vm126, %v325
    %v330 = vld [vmem:[%s242] sm:$0xff]
    %v331 = vld [vmem:[%s242 + $0x8] sm:$0xff]
    %v332 = vld [vmem:[%s131] sm:$0xff]
    %v333 = vld [vmem:[%s131 + $0x8] sm:$0xff]
    %336 = vrot.lane.b32.xlu0 %v330, 64
    %v337 = vpop.permute.xlu0 %336
    %338 = vrot.lane.b32.xlu0 %v331, 64
    %v339 = vpop.permute.xlu0 %338
    %v343 = vsel %vm44, %v332, 0
    %v346 = vsel %vm44, %v333, 0
    %348 = vmatprep.subr.mxu0 0.0
    %349 = vmatpush1.msra.mxu0 %v337
    %350 = vmatprep.subr.mxu0 0.0
    %351 = vmatpush1.msra.mxu0 %v339
    %352 = vmatprep.subr.mxu0 0.0
    %353 = vmatpush1.msra.mxu0 0.0
    %354 = vmatprep.subr.mxu0 0.0
    %355 = vmatpush1.msra.mxu0 0.0
    %356 = vmatprep.subr.mxu0 0.0
    %357 = vmatpush1.msra.mxu0 0.0
    %358 = vmatprep.subr.mxu0 0.0
    %359 = vmatpush1.msra.mxu0 0.0
    %360 = vmatprep.subr.mxu0 0.0
    %361 = vmatpush1.msra.mxu0 0.0
    %362 = vmatprep.subr.mxu0 0.0
    %363 = vmatpush1.msra.mxu0 0.0
    %364 = vmatprep.subr.mxu0 0.0
    %365 = vmatpush1.msra.mxu0 0.0
    %366 = vmatprep.subr.mxu0 0.0
    %367 = vmatpush1.msra.mxu0 0.0
    %368 = vmatprep.subr.mxu0 0.0
    %369 = vmatpush1.msra.mxu0 0.0
    %370 = vmatprep.subr.mxu0 0.0
    %371 = vmatpush1.msra.mxu0 0.0
    %372 = vmatprep.subr.mxu0 0.0
    %373 = vmatpush1.msra.mxu0 0.0
    %374 = vmatprep.subr.mxu0 0.0
    %375 = vmatpush1.msra.mxu0 0.0
    %376 = vmatprep.subr.mxu0 0.0
    %377 = vmatpush1.msra.mxu0 0.0
    %378 = vmatprep.subr.mxu0 0.0
    %379 = vmatpush1.msra.mxu0 0.0
    %380 = vmatprep.subr.mxu0 0.0
    %381 = vmatpush1.msra.mxu0 0.0
    %382 = vmatprep.subr.mxu0 0.0
    %383 = vmatpush1.msra.mxu0 0.0
    %384 = vmatprep.subr.mxu0 0.0
    %385 = vmatpush1.msra.mxu0 0.0
    %386 = vmatprep.subr.mxu0 0.0
    %387 = vmatpush1.msra.mxu0 0.0
    %388 = vmatprep.subr.mxu0 0.0
    %389 = vmatpush1.msra.mxu0 0.0
    %390 = vmatprep.subr.mxu0 0.0
    %391 = vmatpush1.msra.mxu0 0.0
    %392 = vmatprep.subr.mxu0 0.0
    %393 = vmatpush1.msra.mxu0 0.0
    %394 = vmatprep.subr.mxu0 0.0
    %395 = vmatpush1.msra.mxu0 0.0
    %396 = vmatprep.subr.mxu0 0.0
    %397 = vmatpush1.msra.mxu0 0.0
    %398 = vmatprep.subr.mxu0 0.0
    %399 = vmatpush1.msra.mxu0 0.0
    %400 = vmatprep.subr.mxu0 0.0
    %401 = vmatpush1.msra.mxu0 0.0
    %402 = vmatprep.subr.mxu0 0.0
    %403 = vmatpush1.msra.mxu0 0.0
    %404 = vmatprep.subr.mxu0 0.0
    %405 = vmatpush1.msra.mxu0 0.0
    %406 = vmatprep.subr.mxu0 0.0
    %407 = vmatpush1.msra.mxu0 0.0
    %408 = vmatprep.subr.mxu0 0.0
    %409 = vmatpush1.msra.mxu0 0.0
    %410 = vmatprep.subr.mxu0 0.0
    %411 = vmatpush1.msra.mxu0 0.0
    %412 = vmatprep.mubr.f32.mxu0 0.0
    %413 = vmatmul.mubr.f32.gmra.mrb[0].mxu0 %v343
    %v414 = vpop.f32.mrb[0].mxu0
    %v415 = vadd.f32 0.0, %v414
    %v416 = vpop.f32.mrb[0].mxu0
    %417 = vmatprep.mubr.f32.mxu0 0.0
    %418 = vmatmul.mubr.f32.gmra.mrb[0].mxu0 %v346
    %v419 = vpop.f32.mrb[0].mxu0
    %v420 = vadd.f32 0.0, %v419
    %v421 = vpop.f32.mrb[0].mxu0
    %422 = vdwg.mxu0
    %425 = vrot.lane.b32.xlu0 %v415, 64
    %v426 = vpop.permute.xlu0 %425
    %427 = vrot.lane.b32.xlu0 %v420, 64
    %v428 = vpop.permute.xlu0 %427
    %431 = vst.msk [vmem:[#allocation2] sm:$0xff] %vm231, %v426
    %432 = vst.msk [vmem:[#allocation2 + $0x8] sm:$0xff] %vm231, %v428
    %v433 = vld [vmem:[#allocation2] sm:$0xff]
    %v434 = vld [vmem:[#allocation2 + $0x8] sm:$0xff]
    %v435 = vld [vmem:[%s242] sm:$0xff]
    %v436 = vld [vmem:[%s242 + $0x8] sm:$0xff]
    %v437 = vadd.f32 %v433, %v435
    %v438 = vadd.f32 %v434, %v436
    %s439 = scalar_lea.vmem [#allocation8], 16
    %440 = vst [vmem:[%s439] sm:$0xff] %v437
    %441 = vst [vmem:[%s439 + $0x8] sm:$0xff] %v438
    // Predicated region
    $region18: #{tpu_custom_call.1} parent=1 // pred_check
      _
    $region19: #{tpu_custom_call.1} parent=1 // pred_check_branch
      %443 = sbr.rel (0) target = $region21
    $region20: #{tpu_custom_call.1} parent=1 // pred_region
      %s445 = ssub.s32 512, 512
      %446 = vsyncadd [#allocation5], %s445
      %s447 = sshll.u32 [#allocation8], 4
      %s448 = int_to_ptr.vmem [resolvable:$true] %s447
      %453 = dma.vmem_to_hbm [thread:$0]  %s448, 512, %s2, [#allocation5], 128, 128, 8
    $region21: #{tpu_custom_call.1} parent=1 // pred_fallthru
      _
    // Predicated region
    $region22: #{tpu_custom_call.1} parent=1 // pred_check
      _
    $region23: #{tpu_custom_call.1} parent=1 // pred_check_branch
      %455 = sbr.rel (0) target = $region25
    $region24: #{tpu_custom_call.1} parent=1 // pred_region
      %456 = dma.done [#allocation5], 512
    $region25: #{tpu_custom_call.1} parent=1 // pred_fallthru
      _
    %457 = vsyncpa [#allocation4], 1
    %458 = vsyncpa [#allocation7], 1
    %459 = vsyncpa [#allocation5], 1

</llo_original>
